<compile_context>
chip_gen: v6e
topology: v6e:2x2x1
jax: 0.10.0
libtpu: 0.0.40
codegen_flags: <defaults>
</compile_context>

<pallas_src>
import jax
import jax.numpy as jnp
from jax.experimental import pallas as pl
from jax.experimental.pallas import tpu as pltpu

_SMEM = pl.BlockSpec(memory_space=pltpu.MemorySpace.SMEM)
_VMEM = pl.BlockSpec(memory_space=pltpu.MemorySpace.VMEM)

# Per-tensor row thresholds.  Rows occupy a full 128-lane vreg row in VMEM, so
# 4096 f32 rows ~= 2 MiB per buffer regardless of the (narrow) channel count.
_GRIDLESS_MAX_ROWS = 4096   # gridless full-block path (in+out <= ~8 MiB fused worst case)
_TILE_ROWS = 4096           # row tile for the grid fallback (<= ~8 MiB double-buffered)


def _fused_kernel(factor_ref, dummy_ref, f_ref, e_ref, fo_ref, eo_ref):
    # factor_ref / dummy_ref: SMEM scalars of shape (1,)
    # f_ref/fo_ref: [N, 3] forces, e_ref/eo_ref: [F, 1] total_energy (full blocks)
    fac = factor_ref[0]
    bias = 0.0 * dummy_ref[0]  # keep exact forward semantics (incl. NaN propagation)
    fo_ref[...] = (fac * f_ref[...] + bias).astype(fo_ref.dtype)
    eo_ref[...] = (fac * e_ref[...] + bias).astype(eo_ref.dtype)


def _scale_kernel(factor_ref, dummy_ref, x_ref, o_ref):
    fac = factor_ref[0]
    bias = 0.0 * dummy_ref[0]
    o_ref[...] = (fac * x_ref[...] + bias).astype(o_ref.dtype)


def _scale_one(x: jax.Array, factor: jax.Array, dummy: jax.Array) -> jax.Array:
    """y = factor * x + 0.0 * dummy for one 2-D tensor, in its own dtype."""
    n, c = x.shape
    if n <= _GRIDLESS_MAX_ROWS:
        # Gridless: single full-array block, no pipeline scaffolding.
        return pl.pallas_call(
            _scale_kernel,
            out_shape=jax.ShapeDtypeStruct(x.shape, x.dtype),
            in_specs=[_SMEM, _SMEM, _VMEM],
            out_specs=_VMEM,
            input_output_aliases={2: 0},
        )(factor, dummy, x)

    # Row-tiled fallback; last block dim == full array dim, row tile divisible by 8.
    n_tiles = pl.cdiv(n, _TILE_ROWS)
    return pl.pallas_call(
        _scale_kernel,
        out_shape=jax.ShapeDtypeStruct(x.shape, x.dtype),
        grid=(n_tiles,),
        in_specs=[_SMEM, _SMEM,
                  pl.BlockSpec((_TILE_ROWS, c), lambda i: (i, 0))],
        out_specs=pl.BlockSpec((_TILE_ROWS, c), lambda i: (i, 0)),
        input_output_aliases={2: 0},
        compiler_params=pltpu.CompilerParams(dimension_semantics=("parallel",)),
    )(factor, dummy, x)


def const_factor_model_forward(data: dict, factor: jax.Array, dummy: jax.Array) -> dict:
    """Pallas equivalent of ConstFactorModel.forward on an AtomicDataDict-like dict."""
    forces = data["forces"]           # [num_atoms, 3]  ('1o')
    energy = data["total_energy"]     # [num_frames, 1] ('0e')

    factor = jnp.asarray(factor, jnp.float32).reshape(1)
    dummy = jnp.asarray(dummy, jnp.float32).reshape(1)

    out = dict(data)
    if forces.shape[0] <= _GRIDLESS_MAX_ROWS and energy.shape[0] <= _GRIDLESS_MAX_ROWS:
        # Common case: one fused, gridless pallas_call (single dispatch).
        f_out, e_out = pl.pallas_call(
            _fused_kernel,
            out_shape=(jax.ShapeDtypeStruct(forces.shape, forces.dtype),
                       jax.ShapeDtypeStruct(energy.shape, energy.dtype)),
            in_specs=[_SMEM, _SMEM, _VMEM, _VMEM],
            out_specs=(_VMEM, _VMEM),
            input_output_aliases={2: 0, 3: 1},
        )(factor, dummy, forces, energy)
        out["forces"], out["total_energy"] = f_out, e_out
    else:
        # Large inputs: per-tensor calls (each picks gridless vs. row-tiled itself).
        out["forces"] = _scale_one(forces, factor, dummy)
        out["total_energy"] = _scale_one(energy, factor, dummy)
    return out


if __name__ == "__main__":
    key = jax.random.PRNGKey(0)
    k_factor, k_f1, k_e1, k_f2, k_e2 = jax.random.split(key, 5)

    # Parameters / buffers (mirroring __init__ shapes):
    #   dummy  = nn.Parameter(zeros(1))
    #   factor = buffer: 3.7777 * randn(1).squeeze()   (kept as (1,) for SMEM)
    dummy = jnp.zeros((1,), jnp.float32)
    factor = (3.7777 * jax.random.normal(k_factor, (1,))).astype(jnp.float32)

    def reference(d):
        return {
            "forces": factor[0] * d["forces"] + 0.0 * dummy[0],
            "total_energy": factor[0] * d["total_energy"] + 0.0 * dummy[0],
        }

    # Case 1 (gridless fused path): 8 atoms, 2 frames.
    data_small = {
        "forces": jax.random.normal(k_f1, (8, 3), jnp.float32),          # '1o'
        "total_energy": jax.random.normal(k_e1, (2, 1), jnp.float32),    # '0e'
    }
    # Case 2 (row-tiled fallback, incl. a partial final block): 9000 atoms, 16 frames.
    data_big = {
        "forces": jax.random.normal(k_f2, (9000, 3), jnp.float32),
        "total_energy": jax.random.normal(k_e2, (16, 1), jnp.float32),
    }

    for data in (data_small, data_big):
        ref = reference(data)  # compute reference before the (possibly aliasing) kernel
        out = jax.block_until_ready(const_factor_model_forward(dict(data), factor, dummy))

        assert out["forces"].shape == data["forces"].shape
        assert out["forces"].dtype == data["forces"].dtype
        assert out["total_energy"].shape == data["total_energy"].shape
        assert out["total_energy"].dtype == data["total_energy"].dtype
        assert jnp.allclose(out["forces"], ref["forces"], atol=1e-6)
        assert jnp.allclose(out["total_energy"], ref["total_energy"], atol=1e-6)

    print("KERNEL_OK")
</pallas_src>

<mosaic_0001>
module attributes {stable_mosaic.version = 11 : i64} {
  func.func @_fused_kernel(%arg0: memref<1xf32, #tpu.memory_space<smem>>, %arg1: memref<1xf32, #tpu.memory_space<smem>>, %arg2: memref<8x3xf32, #tpu.memory_space<vmem>>, %arg3: memref<2x1xf32, #tpu.memory_space<vmem>>, %arg4: memref<8x3xf32, #tpu.memory_space<vmem>>, %arg5: memref<2x1xf32, #tpu.memory_space<vmem>>) attributes {dimension_semantics = [], scalar_prefetch = 0 : i64, scratch_operands = 0 : i64, tpu.core_type = #tpu.core_type<tc>} {
    %c0 = arith.constant 0 : index
    %0 = memref.load %arg0[%c0] : memref<1xf32, #tpu.memory_space<smem>>
    %c0_0 = arith.constant 0 : index
    %1 = memref.load %arg1[%c0_0] : memref<1xf32, #tpu.memory_space<smem>>
    %cst = arith.constant 0.000000e+00 : f32
    %2 = arith.mulf %cst, %1 : f32
    %c0_1 = arith.constant 0 : index
    %c0_2 = arith.constant 0 : index
    %3 = vector.load %arg2[%c0_1, %c0_2] : memref<8x3xf32, #tpu.memory_space<vmem>>, vector<8x3xf32>
    %4 = vector.broadcast %0 : f32 to vector<8x3xf32>
    %5 = arith.mulf %4, %3 : vector<8x3xf32>
    %6 = vector.broadcast %2 : f32 to vector<8x3xf32>
    %7 = arith.addf %5, %6 : vector<8x3xf32>
    %c0_3 = arith.constant 0 : index
    %c0_4 = arith.constant 0 : index
    %8 = vector.load %arg4[%c0_3, %c0_4] : memref<8x3xf32, #tpu.memory_space<vmem>>, vector<8x3xf32>
    tpu.vector_store %arg4[%c0_3, %c0_4], %7 {strides = array<i32>} : memref<8x3xf32, #tpu.memory_space<vmem>>, vector<8x3xf32>,
    %c0_5 = arith.constant 0 : index
    %c0_6 = arith.constant 0 : index
    %9 = vector.load %arg3[%c0_5, %c0_6] : memref<2x1xf32, #tpu.memory_space<vmem>>, vector<2x1xf32>
    %10 = vector.broadcast %0 : f32 to vector<2x1xf32>
    %11 = arith.mulf %10, %9 : vector<2x1xf32>
    %12 = vector.broadcast %2 : f32 to vector<2x1xf32>
    %13 = arith.addf %11, %12 : vector<2x1xf32>
    %c0_7 = arith.constant 0 : index
    %c0_8 = arith.constant 0 : index
    %14 = vector.load %arg5[%c0_7, %c0_8] : memref<2x1xf32, #tpu.memory_space<vmem>>, vector<2x1xf32>
    tpu.vector_store %arg5[%c0_7, %c0_8], %13 {strides = array<i32>} : memref<2x1xf32, #tpu.memory_space<vmem>>, vector<2x1xf32>,
    return
  }
}

</mosaic_0001>

<llo_original>
// kernel: tpu_custom_call.1
$region0: #{tpu_custom_call.1}
  #allocation0 [shape = 'u32[]', space=smem, size = 0x4, offset = 0x4, fixed_abs, tag = 'smem constant byte address 0x4 - core index']
  #allocation1 [shape = 'u32[144,128]{1,0:T(1,128)}', space=vmem, size = 0x12000, scoped, tag = 'internal scratch']
  #allocation2 [shape = 'f32[1]{0:T(128)S(6)}', space=smem, size = 0x200, scoped, tag = 'scoped memory for tpu_custom_call.1']
  #allocation3 [shape = 'f32[1]{0:T(128)S(6)}', space=smem, size = 0x200, scoped, tag = 'scoped memory for tpu_custom_call.1']
  %s0 = inlined_call_operand.<no memory space> [shape: f32[1], index: 0, kind: input, shape index: {}]
  %s1 = inlined_call_operand.<no memory space> [shape: f32[1], index: 1, kind: input, shape index: {}]
  %s2 = inlined_call_operand.vmem [shape: f32[8,3], index: 2, kind: input, shape index: {}, may-alias: {2,4}]
  %s3 = inlined_call_operand.vmem [shape: f32[2,1], index: 3, kind: input, shape index: {}, may-alias: {3,5}]
  %s4 = inlined_call_operand.vmem [shape: f32[8,3], index: 4, kind: output, shape index: {0}, may-alias: {2,4}]
  %s5 = inlined_call_operand.vmem [shape: f32[2,1], index: 5, kind: output, shape index: {1}, may-alias: {3,5}]
  %6 = xla_tuple %s4, %s5
  %s7 = sld [smem:[#allocation0]]
  $region34: #{tpu_custom_call.1} parent=0
    _
  %s9 = ssub.s32 1, %s7
  %s10 = scalar_select 0, %s9, %s7
  %11 = sst [smem:[#allocation2]] %s0
  %12 = sst [smem:[#allocation3]] %s1
  // Predicated region
  $region2: #{tpu_custom_call.1} parent=0 // pred_check
    _
  $region3: #{tpu_custom_call.1} parent=0 // pred_check_branch
    %14 = sbr.rel (0) target = $region5
  $region4: #{tpu_custom_call.1} parent=0 // pred_region
    _
  $region5: #{tpu_custom_call.1} parent=0 // pred_fallthru
    _
  // Predicated region
  $region6: #{tpu_custom_call.1} parent=0 // pred_check
    _
  $region7: #{tpu_custom_call.1} parent=0 // pred_check_branch
    %16 = sbr.rel (0) target = $region9
  $region8: #{tpu_custom_call.1} parent=0 // pred_region
    _
  $region9: #{tpu_custom_call.1} parent=0 // pred_fallthru
    _
  // Predicated region
  $region10: #{tpu_custom_call.1} parent=0 // pred_check
    _
  $region11: #{tpu_custom_call.1} parent=0 // pred_check_branch
    %18 = sbr.rel (0) target = $region13
  $region12: #{tpu_custom_call.1} parent=0 // pred_region
    _
  $region13: #{tpu_custom_call.1} parent=0 // pred_fallthru
    _
  // Predicated region
  $region14: #{tpu_custom_call.1} parent=0 // pred_check
    _
  $region15: #{tpu_custom_call.1} parent=0 // pred_check_branch
    %20 = sbr.rel (0) target = $region17
  $region16: #{tpu_custom_call.1} parent=0 // pred_region
    _
  $region17: #{tpu_custom_call.1} parent=0 // pred_fallthru
    _
  %s21 = sld [smem:[#allocation2]]
  %s22 = sld [smem:[#allocation3]]
  %s23 = smul.f32 %s22, 0.0
  %v24 = vld [vmem:[%s2] sm:$0xff]
  %v25 = vstv %s21
  %v26 = vmul.f32 %v25, %v24
  %v27 = vstv %s23
  %v28 = vadd.f32 %v26, %v27
  %vm29 = vcmask 23552
  %30 = vst.msk [vmem:[%s4] sm:$0xff] %vm29, %v28
  %v31 = vld [vmem:[%s3] sm:$0x3]
  %v32 = vmul.f32 %v25, %v31
  %v33 = vadd.f32 %v32, %v27
  %vm34 = vcmask 1024
  %35 = vst.msk [vmem:[%s5] sm:$0x3] %vm34, %v33
  // Predicated region
  $region18: #{tpu_custom_call.1} parent=0 // pred_check
    _
  $region19: #{tpu_custom_call.1} parent=0 // pred_check_branch
    %37 = sbr.rel (0) target = $region21
  $region20: #{tpu_custom_call.1} parent=0 // pred_region
    _
  $region21: #{tpu_custom_call.1} parent=0 // pred_fallthru
    _
  // Predicated region
  $region22: #{tpu_custom_call.1} parent=0 // pred_check
    _
  $region23: #{tpu_custom_call.1} parent=0 // pred_check_branch
    %39 = sbr.rel (0) target = $region25
  $region24: #{tpu_custom_call.1} parent=0 // pred_region
    _
  $region25: #{tpu_custom_call.1} parent=0 // pred_fallthru
    _
  // Predicated region
  $region26: #{tpu_custom_call.1} parent=0 // pred_check
    _
  $region27: #{tpu_custom_call.1} parent=0 // pred_check_branch
    %41 = sbr.rel (0) target = $region29
  $region28: #{tpu_custom_call.1} parent=0 // pred_region
    _
  $region29: #{tpu_custom_call.1} parent=0 // pred_fallthru
    _
  // Predicated region
  $region30: #{tpu_custom_call.1} parent=0 // pred_check
    _
  $region31: #{tpu_custom_call.1} parent=0 // pred_check_branch
    %43 = sbr.rel (0) target = $region33
  $region32: #{tpu_custom_call.1} parent=0 // pred_region
    _
  $region33: #{tpu_custom_call.1} parent=0 // pred_fallthru
    _

</llo_original>
